<compile_context>
chip_gen: v7x
topology: tpu7x:2x2x1
jax: 0.10.0
libtpu: 0.0.40
codegen_flags: <defaults>
</compile_context>

<pallas_src>
import functools

import jax
import jax.numpy as jnp
from jax import lax
from jax.experimental import pallas as pl
from jax.experimental.pallas import tpu as pltpu


def _round_up(n, m):
    return ((n + m - 1) // m) * m


def _pick_tile(n, candidates=(256, 128)):
    for t in candidates:
        if n % t == 0:
            return t
    return n


# --------------------------------------------------------------------------
# Kernel 1: K/V projection.  x (B, S, Hp) f32 -> K, V (B, S, Hp) bf16
# --------------------------------------------------------------------------
def kv_proj_kernel(x_ref, wkv_ref, bkv_ref, k_ref, v_ref):
    Hp = x_ref.shape[-1]
    xb = x_ref[0].astype(jnp.bfloat16)                                # (TS, Hp)
    kv = jnp.dot(xb, wkv_ref[...],
                 preferred_element_type=jnp.float32) + bkv_ref[...]   # (TS, 2Hp)
    k_ref[0] = kv[:, :Hp].astype(jnp.bfloat16)
    v_ref[0] = kv[:, Hp:].astype(jnp.bfloat16)


# --------------------------------------------------------------------------
# Kernel 2: attention (flash-style over K/V tiles) + residual/LN + FFN + LN
# --------------------------------------------------------------------------
def encoder_block_kernel(
    h_real,              # python float: real (unpadded) hidden width
    x_q_ref,             # (1, TQ, Hp) f32  query tile / residual input
    k_ref, v_ref,        # (1, TK, Hp) bf16 streamed K / V tiles
    wq_ref, bq_ref,      # (Hp, Hp) bf16, (1, Hp) f32   (1/sqrt(H) folded in)
    wo_ref, bo_ref,      # (Hp, Hp) bf16, (1, Hp) f32   MHA out_proj
    g1_ref, be1_ref,     # (1, Hp) f32                  norm1
    w1_ref, b1_ref,      # (Hp, Fp) bf16, (1, Fp) f32   fc1
    w2_ref, b2_ref,      # (Fp, Hp) bf16, (1, Hp) f32   fc2
    g2_ref, be2_ref,     # (1, Hp) f32                  norm2
    o_ref,               # (1, TQ, Hp)
    q_scr, m_scr, l_scr, acc_scr,
):
    kv_i = pl.program_id(2)

    # ---- init running stats + project Q for this query tile (once) ----
    @pl.when(kv_i == 0)
    def _():
        m_scr[...] = jnp.full_like(m_scr, -jnp.inf)
        l_scr[...] = jnp.zeros_like(l_scr)
        acc_scr[...] = jnp.zeros_like(acc_scr)
        xq = x_q_ref[0].astype(jnp.bfloat16)
        q = jnp.dot(xq, wq_ref[...],
                    preferred_element_type=jnp.float32) + bq_ref[...]
        q_scr[...] = q.astype(jnp.bfloat16)

    # ---- online-softmax update for this K/V tile ----
    q = q_scr[...]                                                    # (TQ, Hp)
    k = k_ref[0]                                                      # (TK, Hp)
    v = v_ref[0]                                                      # (TK, Hp)
    s = lax.dot_general(q, k, (((1,), (1,)), ((), ())),
                        preferred_element_type=jnp.float32)           # (TQ, TK)
    m_new = jnp.maximum(m_scr[...], jnp.max(s, axis=-1, keepdims=True))
    alpha = jnp.exp(m_scr[...] - m_new)
    p = jnp.exp(s - m_new)
    l_scr[...] = alpha * l_scr[...] + jnp.sum(p, axis=-1, keepdims=True)
    acc_scr[...] = alpha * acc_scr[...] + jnp.dot(
        p.astype(jnp.bfloat16), v, preferred_element_type=jnp.float32)
    m_scr[...] = m_new

    # ---- finalize: out_proj, residual+LN1, FFN, residual+LN2 ----
    @pl.when(kv_i == pl.num_programs(2) - 1)
    def _():
        inv_h = 1.0 / h_real
        attn = acc_scr[...] * pl.reciprocal(l_scr[...], approx=False)
        y = jnp.dot(attn.astype(jnp.bfloat16), wo_ref[...],
                    preferred_element_type=jnp.float32) + bo_ref[...]

        # Padded hidden columns are exactly zero at every stage (padded
        # weights/biases/gamma/beta are zero), so sums over the padded axis
        # divided by the real width give the exact unpadded LayerNorm stats.
        z = x_q_ref[0].astype(jnp.float32) + y
        mu = jnp.sum(z, axis=-1, keepdims=True) * inv_h
        var = jnp.sum(z * z, axis=-1, keepdims=True) * inv_h - mu * mu
        z = (z - mu) * lax.rsqrt(var + 1e-5) * g1_ref[...] + be1_ref[...]

        h = jnp.dot(z.astype(jnp.bfloat16), w1_ref[...],
                    preferred_element_type=jnp.float32) + b1_ref[...]
        h = jnp.maximum(h, 0.0)
        y2 = jnp.dot(h.astype(jnp.bfloat16), w2_ref[...],
                     preferred_element_type=jnp.float32) + b2_ref[...]

        z2 = z + y2
        mu2 = jnp.sum(z2, axis=-1, keepdims=True) * inv_h
        var2 = jnp.sum(z2 * z2, axis=-1, keepdims=True) * inv_h - mu2 * mu2
        out = (z2 - mu2) * lax.rsqrt(var2 + 1e-5) * g2_ref[...] + be2_ref[...]
        o_ref[0] = out.astype(o_ref.dtype)


# --------------------------------------------------------------------------
# Wrapper
# --------------------------------------------------------------------------
def encoder_layer(x, params):
    """x: (B, S, H) float32.  params: dict from prepare_params()."""
    B, S, H = x.shape
    Hp = params["wq"].shape[0]
    Fp = params["w1"].shape[1]
    h_real = params["h_real"]
    assert H == h_real

    x_p = jnp.pad(x, ((0, 0), (0, 0), (0, Hp - H))) if Hp != H else x

    vmem_cap = 64 * 1024 * 1024
    try:
        vmem_cap = int(pltpu.get_tpu_info().vmem_capacity_bytes)
    except Exception:
        pass

    # ---------------- pass 1: K/V projection ----------------
    TS = _pick_tile(S)
    ns = S // TS

    kv_need = (2 * TS * Hp * 4                 # x tile, double-buffered
               + Hp * 2 * Hp * 2 + 2 * Hp * 4  # wkv (Buffered(1)) + bkv
               + 2 * 2 * TS * Hp * 2           # K, V output tiles
               + TS * 2 * Hp * 4)              # f32 qkv intermediate
    kv_vmem = min(max(int(kv_need) + (4 << 20), 16 << 20), vmem_cap - (2 << 20))

    k_arr, v_arr = pl.pallas_call(
        kv_proj_kernel,
        out_shape=(jax.ShapeDtypeStruct((B, S, Hp), jnp.bfloat16),
                   jax.ShapeDtypeStruct((B, S, Hp), jnp.bfloat16)),
        grid_spec=pltpu.PrefetchScalarGridSpec(
            num_scalar_prefetch=0,
            grid=(B, ns),
            in_specs=[
                pl.BlockSpec((1, TS, Hp), lambda b, s: (b, s, 0)),
                pl.BlockSpec((Hp, 2 * Hp), lambda b, s: (0, 0),
                             pipeline_mode=pl.Buffered(1)),
                pl.BlockSpec((1, 2 * Hp), lambda b, s: (0, 0),
                             pipeline_mode=pl.Buffered(1)),
            ],
            out_specs=(pl.BlockSpec((1, TS, Hp), lambda b, s: (b, s, 0)),
                       pl.BlockSpec((1, TS, Hp), lambda b, s: (b, s, 0))),
        ),
        compiler_params=pltpu.CompilerParams(
            dimension_semantics=("parallel", "parallel"),
            vmem_limit_bytes=kv_vmem,
        ),
    )(x_p, params["wkv"], params["bkv"])

    # ---------------- pass 2: attention + FFN ----------------
    TQ = _pick_tile(S)
    TK = _pick_tile(S)
    nq = S // TQ
    nkv = S // TK

    def const_spec(shape):
        nd = len(shape)
        return pl.BlockSpec(shape, lambda b, q, k, _nd=nd: (0,) * _nd,
                            pipeline_mode=pl.Buffered(1))

    in_specs = [
        pl.BlockSpec((1, TQ, Hp), lambda b, q, k: (b, q, 0)),   # x query tile
        pl.BlockSpec((1, TK, Hp), lambda b, q, k: (b, k, 0)),   # K tile
        pl.BlockSpec((1, TK, Hp), lambda b, q, k: (b, k, 0)),   # V tile
        const_spec((Hp, Hp)), const_spec((1, Hp)),              # wq, bq
        const_spec((Hp, Hp)), const_spec((1, Hp)),              # wo, bo
        const_spec((1, Hp)), const_spec((1, Hp)),               # g1, beta1
        const_spec((Hp, Fp)), const_spec((1, Fp)),              # w1, b1
        const_spec((Fp, Hp)), const_spec((1, Hp)),              # w2, b2
        const_spec((1, Hp)), const_spec((1, Hp)),               # g2, beta2
    ]

    grid_spec = pltpu.PrefetchScalarGridSpec(
        num_scalar_prefetch=0,
        grid=(B, nq, nkv),
        in_specs=in_specs,
        out_specs=pl.BlockSpec((1, TQ, Hp), lambda b, q, k: (b, q, 0)),
        scratch_shapes=[
            pltpu.VMEM((TQ, Hp), jnp.bfloat16),   # Q for this query tile
            pltpu.VMEM((TQ, 1), jnp.float32),     # running max
            pltpu.VMEM((TQ, 1), jnp.float32),     # running denom
            pltpu.VMEM((TQ, Hp), jnp.float32),    # output accumulator
        ],
    )

    w_bytes = (2 * Hp * Hp + 2 * Hp * Fp) * 2 + (8 * Hp + Fp) * 4
    flops = int(2 * B * S * (4 * Hp * Hp + 2 * Hp * Fp) + 4 * B * S * S * Hp)
    cost = pl.CostEstimate(
        flops=flops,
        transcendentals=int(B * S * S),
        bytes_accessed=int(B * S * Hp * (4 + 2 + 2 + 4) + w_bytes),
    )

    need = (2 * TQ * Hp * 4            # x_q (double-buffered)
            + 2 * 2 * TK * Hp * 2      # K, V tiles (double-buffered)
            + 2 * TQ * Hp * 4          # output block (double-buffered)
            + w_bytes                  # weights, single-buffered
            + TQ * Hp * (2 + 4)        # q + acc scratch
            + 2 * TQ * TK * 4          # scores / probs
            + TQ * Fp * 4              # FFN hidden
            + 2 * TQ * Hp * 4)         # LN temporaries
    vmem_limit = min(max(int(need) + (8 << 20), 32 << 20), vmem_cap - (2 << 20))

    out_p = pl.pallas_call(
        functools.partial(encoder_block_kernel, float(h_real)),
        out_shape=jax.ShapeDtypeStruct((B, S, Hp), x.dtype),
        grid_spec=grid_spec,
        compiler_params=pltpu.CompilerParams(
            dimension_semantics=("parallel", "parallel", "arbitrary"),
            vmem_limit_bytes=vmem_limit,
        ),
        cost_estimate=cost,
    )(x_p, k_arr, v_arr,
      params["wq"], params["bq"], params["wo"], params["bo"],
      params["g1"], params["beta1"], params["w1"], params["b1"],
      params["w2"], params["b2"], params["g2"], params["beta2"])

    return out_p[:, :, :H] if Hp != H else out_p


# --------------------------------------------------------------------------
# Parameters (PyTorch layout) and conversion to kernel layout
# --------------------------------------------------------------------------
def init_torch_params(key, H, F):
    """Deterministic synthetic params in PyTorch layout (weight = (out, in))."""
    ks = jax.random.split(key, 8)
    s = 0.05
    return {
        "in_proj_weight": s * jax.random.normal(ks[0], (3 * H, H), jnp.float32),
        "in_proj_bias":   s * jax.random.normal(ks[1], (3 * H,), jnp.float32),
        "out_proj_weight": s * jax.random.normal(ks[2], (H, H), jnp.float32),
        "out_proj_bias":   s * jax.random.normal(ks[3], (H,), jnp.float32),
        "norm1_gamma": jnp.ones((H,), jnp.float32),
        "norm1_beta":  jnp.zeros((H,), jnp.float32),
        "fc1_weight": s * jax.random.normal(ks[4], (F, H), jnp.float32),
        "fc1_bias":   s * jax.random.normal(ks[5], (F,), jnp.float32),
        "fc2_weight": s * jax.random.normal(ks[6], (H, F), jnp.float32),
        "fc2_bias":   s * jax.random.normal(ks[7], (H,), jnp.float32),
        "norm2_gamma": jnp.ones((H,), jnp.float32),
        "norm2_beta":  jnp.zeros((H,), jnp.float32),
    }


def prepare_params(tp, H, F):
    """Transpose to (in, out), fold 1/sqrt(H) into Q, pad H/F to 128-multiples
    (padding = zeros, so LayerNorm/matmul math on padded lanes is exact),
    cast matmul weights to bf16."""
    Hp = _round_up(max(H, 128), 128)
    Fp = _round_up(max(F, 128), 128)
    scale = 1.0 / (float(H) ** 0.5)

    def pad2(w, r, c):
        return jnp.pad(w, ((0, r - w.shape[0]), (0, c - w.shape[1])))

    def pad1(b, n):
        return jnp.pad(b, (0, n - b.shape[0]))[None, :]

    w_in, b_in = tp["in_proj_weight"], tp["in_proj_bias"]
    wq = (w_in[:H] * scale).T
    wk = w_in[H:2 * H].T
    wv = w_in[2 * H:].T
    bq = b_in[:H] * scale
    bk = b_in[H:2 * H]
    bv = b_in[2 * H:]

    wkv = jnp.concatenate([pad2(wk, Hp, Hp), pad2(wv, Hp, Hp)], axis=1)
    bkv = jnp.concatenate([pad1(bk, Hp), pad1(bv, Hp)], axis=1)

    return {
        "h_real": H,
        "wq": pad2(wq, Hp, Hp).astype(jnp.bfloat16),
        "bq": pad1(bq, Hp),
        "wkv": wkv.astype(jnp.bfloat16),
        "bkv": bkv,
        "wo": pad2(tp["out_proj_weight"].T, Hp, Hp).astype(jnp.bfloat16),
        "bo": pad1(tp["out_proj_bias"], Hp),
        "g1": pad1(tp["norm1_gamma"], Hp),
        "beta1": pad1(tp["norm1_beta"], Hp),
        "w1": pad2(tp["fc1_weight"].T, Hp, Fp).astype(jnp.bfloat16),
        "b1": pad1(tp["fc1_bias"], Fp),
        "w2": pad2(tp["fc2_weight"].T, Fp, Hp).astype(jnp.bfloat16),
        "b2": pad1(tp["fc2_bias"], Hp),
        "g2": pad1(tp["norm2_gamma"], Hp),
        "beta2": pad1(tp["norm2_beta"], Hp),
    }


# --------------------------------------------------------------------------
# Pure-JAX f32 reference (matches the PyTorch forward in eval mode)
# --------------------------------------------------------------------------
def _layer_norm(z, g, b):
    mu = jnp.mean(z, axis=-1, keepdims=True)
    var = jnp.mean((z - mu) ** 2, axis=-1, keepdims=True)
    return (z - mu) * jax.lax.rsqrt(var + 1e-5) * g + b


def encoder_layer_ref(x, tp):
    H = x.shape[-1]
    w_in, b_in = tp["in_proj_weight"], tp["in_proj_bias"]
    q = x @ w_in[:H].T + b_in[:H]
    k = x @ w_in[H:2 * H].T + b_in[H:2 * H]
    v = x @ w_in[2 * H:].T + b_in[2 * H:]
    s = (q / jnp.sqrt(jnp.float32(H))) @ jnp.swapaxes(k, -1, -2)
    p = jax.nn.softmax(s, axis=-1)
    y = (p @ v) @ tp["out_proj_weight"].T + tp["out_proj_bias"]
    z = _layer_norm(x + y, tp["norm1_gamma"], tp["norm1_beta"])
    h = jnp.maximum(z @ tp["fc1_weight"].T + tp["fc1_bias"], 0.0)
    y2 = h @ tp["fc2_weight"].T + tp["fc2_bias"]
    return _layer_norm(z + y2, tp["norm2_gamma"], tp["norm2_beta"])


# --------------------------------------------------------------------------
if __name__ == "__main__":
    B, S, H, FFN = 2, 8, 32, 64
    key = jax.random.PRNGKey(0)
    kx, kp = jax.random.split(key)
    x = jax.random.normal(kx, (B, S, H), jnp.float32)

    torch_params = init_torch_params(kp, H, FFN)
    params = prepare_params(torch_params, H, FFN)

    out = encoder_layer(x, params)
    out = jax.block_until_ready(out)

    assert out.shape == (B, S, H)
    assert bool(jnp.all(jnp.isfinite(out)))

    # tolerance accounts for bf16 matmul operands (reference is full f32)
    ref = encoder_layer_ref(x, torch_params)
    max_err = float(jnp.max(jnp.abs(out.astype(jnp.float32) - ref)))
    assert max_err < 5e-2, f"mismatch vs reference: {max_err}"

    print("KERNEL_OK")
</pallas_src>

<mosaic_0001>
module attributes {stable_mosaic.version = 11 : i64} {
  func.func @kv_proj_kernel(%arg0: i32, %arg1: i32, %arg2: memref<1x8x128xf32, #tpu.memory_space<vmem>>, %arg3: memref<128x256xbf16, #tpu.memory_space<vmem>>, %arg4: memref<1x256xf32, #tpu.memory_space<vmem>>, %arg5: memref<1x8x128xbf16, #tpu.memory_space<vmem>>, %arg6: memref<1x8x128xbf16, #tpu.memory_space<vmem>>) attributes {dimension_semantics = [#tpu.dimension_semantics<parallel>, #tpu.dimension_semantics<parallel>], iteration_bounds = array<i64: 2, 1>, scalar_prefetch = 0 : i64, scratch_operands = 0 : i64, tpu.core_type = #tpu.core_type<tc>, window_params = [{transform_indices = @transform_0, window_bounds = array<i64: 1, 8, 128>}, {pipeline_mode = #tpu.pipeline_mode<synchronous>, transform_indices = @transform_1, window_bounds = array<i64: 128, 256>}, {pipeline_mode = #tpu.pipeline_mode<synchronous>, transform_indices = @transform_2, window_bounds = array<i64: 1, 256>}, {transform_indices = @transform_3, window_bounds = array<i64: 1, 8, 128>}, {transform_indices = @transform_4, window_bounds = array<i64: 1, 8, 128>}]} {
    %c0 = arith.constant 0 : index
    %c0_0 = arith.constant 0 : index
    %c0_1 = arith.constant 0 : index
    %0 = vector.load %arg2[%c0, %c0_0, %c0_1] : memref<1x8x128xf32, #tpu.memory_space<vmem>>, vector<1x8x128xf32>
    %1 = vector.shape_cast %0 : vector<1x8x128xf32> to vector<8x128xf32>
    %2 = arith.truncf %1 : vector<8x128xf32> to vector<8x128xbf16>
    %c0_2 = arith.constant 0 : index
    %c0_3 = arith.constant 0 : index
    %3 = vector.load %arg3[%c0_2, %c0_3] : memref<128x256xbf16, #tpu.memory_space<vmem>>, vector<128x256xbf16>
    %cst = arith.constant dense<0.000000e+00> : vector<8x256xf32>
    %4 = tpu.matmul %2, %3, %cst {dimension_numbers = #tpu.dot_dimension_numbers<[1], [0], [0], [1], [0, 0, 1, 1], [], []>} : vector<8x128xbf16>, vector<128x256xbf16>, vector<8x256xf32> -> vector<8x256xf32>
    %c0_4 = arith.constant 0 : index
    %c0_5 = arith.constant 0 : index
    %5 = vector.load %arg4[%c0_4, %c0_5] : memref<1x256xf32, #tpu.memory_space<vmem>>, vector<1x256xf32>
    %6 = vector.broadcast %5 : vector<1x256xf32> to vector<8x256xf32>
    %7 = arith.addf %4, %6 : vector<8x256xf32>
    %8 = vector.extract_strided_slice %7 {offsets = [0, 0], sizes = [8, 128], strides = [1, 1]} : vector<8x256xf32> to vector<8x128xf32>
    %9 = arith.truncf %8 : vector<8x128xf32> to vector<8x128xbf16>
    %c0_6 = arith.constant 0 : index
    %c0_7 = arith.constant 0 : index
    %c0_8 = arith.constant 0 : index
    %10 = vector.load %arg5[%c0_6, %c0_7, %c0_8] : memref<1x8x128xbf16, #tpu.memory_space<vmem>>, vector<1x8x128xbf16>
    %11 = vector.shape_cast %10 : vector<1x8x128xbf16> to vector<8x128xbf16>
    %12 = vector.shape_cast %9 : vector<8x128xbf16> to vector<1x8x128xbf16>
    tpu.vector_store %arg5[%c0_6, %c0_7, %c0_8], %12 {strides = array<i32>} : memref<1x8x128xbf16, #tpu.memory_space<vmem>>, vector<1x8x128xbf16>,
    %13 = vector.extract_strided_slice %7 {offsets = [0, 128], sizes = [8, 128], strides = [1, 1]} : vector<8x256xf32> to vector<8x128xf32>
    %14 = arith.truncf %13 : vector<8x128xf32> to vector<8x128xbf16>
    %c0_9 = arith.constant 0 : index
    %c0_10 = arith.constant 0 : index
    %c0_11 = arith.constant 0 : index
    %15 = vector.load %arg6[%c0_9, %c0_10, %c0_11] : memref<1x8x128xbf16, #tpu.memory_space<vmem>>, vector<1x8x128xbf16>
    %16 = vector.shape_cast %15 : vector<1x8x128xbf16> to vector<8x128xbf16>
    %17 = vector.shape_cast %14 : vector<8x128xbf16> to vector<1x8x128xbf16>
    tpu.vector_store %arg6[%c0_9, %c0_10, %c0_11], %17 {strides = array<i32>} : memref<1x8x128xbf16, #tpu.memory_space<vmem>>, vector<1x8x128xbf16>,
    return
  }
  func.func @transform_0(%arg0: i32, %arg1: i32) -> (i32, i32, i32) {
    %c0_i32 = arith.constant 0 : i32
    %c0_i32_0 = arith.constant 0 : i32
    return %arg0, %arg1, %c0_i32 : i32, i32, i32
  }
  func.func @transform_1(%arg0: i32, %arg1: i32) -> (i32, i32) {
    %c0_i32 = arith.constant 0 : i32
    %c0_i32_0 = arith.constant 0 : i32
    %c0_i32_1 = arith.constant 0 : i32
    return %c0_i32, %c0_i32_0 : i32, i32
  }
  func.func @transform_2(%arg0: i32, %arg1: i32) -> (i32, i32) {
    %c0_i32 = arith.constant 0 : i32
    %c0_i32_0 = arith.constant 0 : i32
    %c0_i32_1 = arith.constant 0 : i32
    return %c0_i32, %c0_i32_0 : i32, i32
  }
  func.func @transform_3(%arg0: i32, %arg1: i32) -> (i32, i32, i32) {
    %c0_i32 = arith.constant 0 : i32
    %c0_i32_0 = arith.constant 0 : i32
    return %arg0, %arg1, %c0_i32 : i32, i32, i32
  }
  func.func @transform_4(%arg0: i32, %arg1: i32) -> (i32, i32, i32) {
    %c0_i32 = arith.constant 0 : i32
    %c0_i32_0 = arith.constant 0 : i32
    return %arg0, %arg1, %c0_i32 : i32, i32, i32
  }
}

</mosaic_0001>

<llo_original>
// kernel: tpu_custom_call.1
$region0: #{tpu_custom_call.1}
  #allocation0 [shape = 'u32[]', space=smem, size = 0x4, offset = 0x4, fixed_abs, tag = 'smem constant byte address 0x4 - core index']
  #allocation1 [shape = 'u32[144,128]{1,0:T(1,128)}', space=vmem, size = 0x12000, scoped, tag = 'internal scratch']
  %s0 = inlined_call_operand.hbm [shape: f32[2,8,128], index: 0, kind: input, shape index: {}]
  %s1 = inlined_call_operand.hbm [shape: bf16[128,256], index: 1, kind: input, shape index: {}]
  %s2 = inlined_call_operand.vmem [shape: f32[1,256], index: 2, kind: input, shape index: {}]
  %s3 = inlined_call_operand.hbm [shape: bf16[2,8,128], index: 3, kind: output, shape index: {0}]
  %s4 = inlined_call_operand.hbm [shape: bf16[2,8,128], index: 4, kind: output, shape index: {1}]
  %5 = xla_tuple %s3, %s4
  %s6 = sld [smem:[#allocation0]]
  $region61: #{tpu_custom_call.1} parent=0
    _
  %s8 = ssub.s32 1, %s6
  %s9 = scalar_select 0, %s8, %s6
  $region1: #{tpu_custom_call.1} parent=0
    #allocation2 [shape = 'u8[8192]{0}', space=vmem, size = 0x2000, scoped, tag = 'input window, operand 0']
    #allocation3 [shape = 's32[2]{0}', space=sflag, size = 0x8, scoped, tag = 'scoped memory for tpu_custom_call.1']
    #allocation4 [shape = 's32[2]{0}', space=sflag, size = 0x8, scoped, tag = 'scoped memory for tpu_custom_call.1']
    #allocation5 [shape = 'u8[65536]{0}', space=vmem, size = 0x10000, scoped, tag = 'input window, operand 1, single buffered']
    #allocation6 [shape = 's32[1]{0}', space=sflag, size = 0x4, scoped, tag = 'scoped memory for tpu_custom_call.1']
    #allocation7 [shape = 'u8[4096]{0}', space=vmem, size = 0x1000, scoped, tag = 'output window, operand 0']
    #allocation8 [shape = 'u8[4096]{0}', space=vmem, size = 0x1000, scoped, tag = 'output window, operand 1']
    #allocation9 [shape = 's32[2]{0}', space=sflag, size = 0x8, scoped, tag = 'scoped memory for tpu_custom_call.1']
    %10 = vsyncpa [#allocation3], 0
    %s11 = scalar_lea.sflag [#allocation3], 1
    %12 = vsyncpa %s11, 0
    %13 = vsyncpa [#allocation6], 0
    %14 = vsyncpa [#allocation4], 0
    %s15 = scalar_lea.sflag [#allocation4], 1
    %16 = vsyncpa %s15, 0
    %17 = vsyncpa [#allocation9], 0
    %s18 = scalar_lea.sflag [#allocation9], 1
    %19 = vsyncpa %s18, 0
    loop: start=0, step=1, limit=4
    $region2: #{tpu_custom_call.1} parent=1 // loop_pre_header
      _
    $region3: #{tpu_custom_call.1} parent=1 // loop_header
      %s21 = sphi 0, %s25
      %p22 = scmp.ge.s32.totalorder %s21, 4
      %s28 = sphi 0, %s40
      %s29 = sphi 0, %s36
      %s30 = sphi 0, %s28
      %s31 = sphi 0, %s29
      %s32 = sphi 0, %s30
      %s33 = sphi 0, %s31
      %s45 = sphi 0, %s47
      %s48 = sphi 0, %s45
      %s49 = sphi 0, %s48
      %s65 = sphi 0, %s49
      %s69 = sphi 0, %s69
      %s71 = sphi 0, %s69
      %s72 = sphi 0, %s71
      %s86 = sphi 0, %s72
      %s90 = sphi 0, %s90
      %s92 = sphi 0, %s90
      %s93 = sphi 0, %s92
      %s107 = sphi 0, %s93
      %s115 = sphi 0, %s117
      %s118 = sphi 0, %s115
      %s119 = sphi 0, %s118
      %s135 = sphi 0, %s119
      %s143 = sphi 0, %s145
      %s146 = sphi 0, %s143
      %s147 = sphi 0, %s146
      %s163 = sphi 0, %s147
    $region4: #{tpu_custom_call.1} parent=1 // loop_header_branch
      %24 = sbr.rel (%p22) target = $region8
    $region5: #{tpu_custom_call.1} parent=1 // loop_body
      %s26 = ssub.s32 %s21, 1
      %s27 = ssub.s32 %s21, 2
      %s34 = sadd.s32 1, %s29
      %p35 = scmp.ge.s32.totalorder %s34, 1
      %s36 = scalar_select %p35, 0, %s34
      %s37 = sadd.s32 1, %s28
      %s38 = scalar_select %p35, %s37, %s28
      %p39 = scmp.ge.s32.totalorder %s38, 2
      %s40 = scalar_select %p39, 0, %s38
      %s41 = ssub.s32 %s28, %s40
      %s42 = ssub.s32 %s29, %s36
      %s43 = sor.u32 %s41, %s42
      %p44 = scmp.eq.s32.totalorder %s43, 0
      %s46 = sadd.s32 %s45, 1
      %s47 = scalar_select %p44, %s45, %s46
      %p50 = pneg %p44
      %p51 = scmp.eq.s32.totalorder %s21, 1
      %p52 = por %p50, %p51
      %p53 = scmp.ne.s32.totalorder %s45, %s48
      %p54 = scmp.eq.s32.totalorder %s21, 0
      %p55 = por %p53, %p54
      %p56 = scmp.ne.s32.totalorder %s45, %s48
      %p57 = scmp.eq.s32.totalorder %s26, 1
      %p58 = por %p56, %p57
      %p59 = scmp.ne.s32.totalorder %s48, %s49
      %p60 = scmp.eq.s32.totalorder %s26, 0
      %p61 = por %p59, %p60
      %p62 = scmp.ne.s32.totalorder %s48, %s49
      %p63 = scmp.eq.s32.totalorder %s27, 1
      %p64 = por %p62, %p63
      %p66 = scmp.ne.s32.totalorder %s49, %s65
      %p67 = scmp.eq.s32.totalorder %s27, 0
      %p68 = por %p66, %p67
      %s70 = sadd.s32 %s69, 1
      %p73 = scmp.eq.s32.totalorder %s21, 1
      %p74 = scmp.ne.s32.totalorder %s69, %s71
      %p75 = scmp.eq.s32.totalorder %s21, 0
      %p76 = por %p74, %p75
      %p77 = scmp.ne.s32.totalorder %s69, %s71
      %p78 = scmp.eq.s32.totalorder %s26, 1
      %p79 = por %p77, %p78
      %p80 = scmp.ne.s32.totalorder %s71, %s72
      %p81 = scmp.eq.s32.totalorder %s26, 0
      %p82 = por %p80, %p81
      %p83 = scmp.ne.s32.totalorder %s71, %s72
      %p84 = scmp.eq.s32.totalorder %s27, 1
      %p85 = por %p83, %p84
      %p87 = scmp.ne.s32.totalorder %s72, %s86
      %p88 = scmp.eq.s32.totalorder %s27, 0
      %p89 = por %p87, %p88
      %s91 = sadd.s32 %s90, 1
      %p94 = scmp.eq.s32.totalorder %s21, 1
      %p95 = scmp.ne.s32.totalorder %s90, %s92
      %p96 = scmp.eq.s32.totalorder %s21, 0
      %p97 = por %p95, %p96
      %p98 = scmp.ne.s32.totalorder %s90, %s92
      %p99 = scmp.eq.s32.totalorder %s26, 1
      %p100 = por %p98, %p99
      %p101 = scmp.ne.s32.totalorder %s92, %s93
      %p102 = scmp.eq.s32.totalorder %s26, 0
      %p103 = por %p101, %p102
      %p104 = scmp.ne.s32.totalorder %s92, %s93
      %p105 = scmp.eq.s32.totalorder %s27, 1
      %p106 = por %p104, %p105
      %p108 = scmp.ne.s32.totalorder %s93, %s107
      %p109 = scmp.eq.s32.totalorder %s27, 0
      %p110 = por %p108, %p109
      %s111 = ssub.s32 %s28, %s40
      %s112 = ssub.s32 %s29, %s36
      %s113 = sor.u32 %s111, %s112
      %p114 = scmp.eq.s32.totalorder %s113, 0
      %s116 = sadd.s32 %s115, 1
      %s117 = scalar_select %p114, %s115, %s116
      %p120 = pneg %p114
      %p121 = scmp.eq.s32.totalorder %s21, 1
      %p122 = por %p120, %p121
      %p123 = scmp.ne.s32.totalorder %s115, %s118
      %p124 = scmp.eq.s32.totalorder %s21, 0
      %p125 = por %p123, %p124
      %p126 = scmp.ne.s32.totalorder %s115, %s118
      %p127 = scmp.eq.s32.totalorder %s26, 1
      %p128 = por %p126, %p127
      %p129 = scmp.ne.s32.totalorder %s118, %s119
      %p130 = scmp.eq.s32.totalorder %s26, 0
      %p131 = por %p129, %p130
      %p132 = scmp.ne.s32.totalorder %s118, %s119
      %p133 = scmp.eq.s32.totalorder %s27, 1
      %p134 = por %p132, %p133
      %p136 = scmp.ne.s32.totalorder %s119, %s135
      %p137 = scmp.eq.s32.totalorder %s27, 0
      %p138 = por %p136, %p137
      %s139 = ssub.s32 %s28, %s40
      %s140 = ssub.s32 %s29, %s36
      %s141 = sor.u32 %s139, %s140
      %p142 = scmp.eq.s32.totalorder %s141, 0
      %s144 = sadd.s32 %s143, 1
      %s145 = scalar_select %p142, %s143, %s144
      %p148 = pneg %p142
      %p149 = scmp.eq.s32.totalorder %s21, 1
      %p150 = por %p148, %p149
      %p151 = scmp.ne.s32.totalorder %s143, %s146
      %p152 = scmp.eq.s32.totalorder %s21, 0
      %p153 = por %p151, %p152
      %p154 = scmp.ne.s32.totalorder %s143, %s146
      %p155 = scmp.eq.s32.totalorder %s26, 1
      %p156 = por %p154, %p155
      %p157 = scmp.ne.s32.totalorder %s146, %s147
      %p158 = scmp.eq.s32.totalorder %s26, 0
      %p159 = por %p157, %p158
      %p160 = scmp.ne.s32.totalorder %s146, %s147
      %p161 = scmp.eq.s32.totalorder %s27, 1
      %p162 = por %p160, %p161
      %p164 = scmp.ne.s32.totalorder %s147, %s163
      %p165 = scmp.eq.s32.totalorder %s27, 0
      %p166 = por %p164, %p165
      %p167 = scmp.le.s32.totalorder 1, %s21
      %p168 = scmp.lt.s32.totalorder %s21, 3
      %p169 = pnand %p167, %p168
      %p170 = pneg %p169
      // Predicated region
      $region9: #{tpu_custom_call.1} parent=5 // pred_check
        _
      $region10: #{tpu_custom_call.1} parent=5 // pred_check_branch
        %172 = sbr.rel (%p169) target = $region12
      $region11: #{tpu_custom_call.1} parent=5 // pred_region
        %s173 = ssub.s32 %s21, 1
        // Predicated region
        $region13: #{tpu_custom_call.1} parent=11 // pred_check
          %p174 = pneg %p82
        $region14: #{tpu_custom_call.1} parent=11 // pred_check_branch
          %176 = sbr.rel (%p174) target = $region16
        $region15: #{tpu_custom_call.1} parent=11 // pred_region
          %s178 = ssub.s32 2048, 2048
          %179 = vsyncadd [#allocation6], %s178
          %s180 = sshll.u32 [#allocation5], 4
          %s181 = int_to_ptr.vmem [resolvable:$true] %s180
          %186 = dma.hbm_to_vmem [thread:$0]  %s1, 2048, %s181, [#allocation6], 128, 128, 8
        $region16: #{tpu_custom_call.1} parent=11 // pred_fallthru
          _
        // Predicated region
        $region17: #{tpu_custom_call.1} parent=11 // pred_check
          %p187 = pneg %p103
        $region18: #{tpu_custom_call.1} parent=11 // pred_check_branch
          %189 = sbr.rel (%p187) target = $region20
        $region19: #{tpu_custom_call.1} parent=11 // pred_region
          _
        $region20: #{tpu_custom_call.1} parent=11 // pred_fallthru
          _
      $region12: #{tpu_custom_call.1} parent=5 // pred_fallthru
        _
      %p190 = scmp.lt.s32.totalorder %s21, 2
      // Predicated region
      $region21: #{tpu_custom_call.1} parent=5 // pred_check
        %p191 = pneg %p190
      $region22: #{tpu_custom_call.1} parent=5 // pred_check_branch
        %193 = sbr.rel (%p191) target = $region24
      $region23: #{tpu_custom_call.1} parent=5 // pred_region
        // Predicated region
        $region25: #{tpu_custom_call.1} parent=23 // pred_check
          %p194 = pneg %p55
        $region26: #{tpu_custom_call.1} parent=23 // pred_check_branch
          %196 = sbr.rel (%p194) target = $region28
        $region27: #{tpu_custom_call.1} parent=23 // pred_region
          %s197 = sand.u32 %s45, 1
          %s198 = scalar_lea.sflag [#allocation3], %s197
          %s199 = sand.u32 %s45, 1
          %s200 = smul.addr %s199, 8
          %s201 = scalar_lea.vmem [#allocation2], %s200
          %s203 = ssub.s32 128, 128
          %204 = vsyncadd %s198, %s203
          %s205 = sadd.s32 %s29, %s28
          %s206 = smul.addr %s205, 128
          %s207 = scalar_lea.hbm %s0, %s206
          %s209 = sshll.u32 %s201, 4
          %s210 = int_to_ptr.vmem [resolvable:$true] %s209
          %212 = dma.hbm_to_vmem [thread:$0]  %s207, 128, %s210, %s198
        $region28: #{tpu_custom_call.1} parent=23 // pred_fallthru
          _
      $region24: #{tpu_custom_call.1} parent=5 // pred_fallthru
        _
      %p213 = scmp.le.s32.totalorder 1, %s21
      %p214 = scmp.lt.s32.totalorder %s21, 3
      %p215 = pnand %p213, %p214
      %p216 = pneg %p215
      // Predicated region
      $region29: #{tpu_custom_call.1} parent=5 // pred_check
        _
      $region30: #{tpu_custom_call.1} parent=5 // pred_check_branch
        %218 = sbr.rel (%p215) target = $region32
      $region31: #{tpu_custom_call.1} parent=5 // pred_region
        %s219 = ssub.s32 %s21, 1
        %s220 = sand.u32 %s48, 1
        %s221 = scalar_lea.sflag [#allocation3], %s220
        %s222 = sand.u32 %s48, 1
        %s223 = smul.addr %s222, 8
        %s224 = scalar_lea.vmem [#allocation2], %s223
        // Predicated region
        $region33: #{tpu_custom_call.1} parent=31 // pred_check
          %p225 = pneg %p61
        $region34: #{tpu_custom_call.1} parent=31 // pred_check_branch
          %227 = sbr.rel (%p225) target = $region36
        $region35: #{tpu_custom_call.1} parent=31 // pred_region
          %228 = dma.done %s221, 128
        $region36: #{tpu_custom_call.1} parent=31 // pred_fallthru
          _
        // Predicated region
        $region37: #{tpu_custom_call.1} parent=31 // pred_check
          %p229 = pneg %p82
        $region38: #{tpu_custom_call.1} parent=31 // pred_check_branch
          %231 = sbr.rel (%p229) target = $region40
        $region39: #{tpu_custom_call.1} parent=31 // pred_region
          %232 = dma.done [#allocation6], 2048
        $region40: #{tpu_custom_call.1} parent=31 // pred_fallthru
          _
        %s233 = sand.u32 %s48, 1
        %s234 = scalar_lea.sflag [#allocation3], %s233
        %s235 = sand.u32 %s48, 1
        %s236 = smul.addr %s235, 8
        %s237 = scalar_lea.vmem [#allocation2], %s236
        %p238 = pneg %p61
        %p239 = pneg %p58
        %p240 = pneg %p82
        %p241 = pneg %p79
        %p242 = pneg %p103
        %p243 = pneg %p100
        %p244 = pneg %p131
        %p245 = pneg %p128
        %s246 = sand.u32 %s118, 1
        %s247 = scalar_lea.sflag [#allocation4], %s246
        %s248 = sand.u32 %s118, 1
        %s249 = smul.addr %s248, 4
        %s250 = scalar_lea.vmem [#allocation7], %s249
        %p251 = pneg %p159
        %p252 = pneg %p156
        %s253 = sand.u32 %s146, 1
        %s254 = scalar_lea.sflag [#allocation9], %s253
        %s255 = sand.u32 %s146, 1
        %s256 = smul.addr %s255, 4
        %s257 = scalar_lea.vmem [#allocation8], %s256
        %v259 = vld [vmem:[%s224] sm:$0xff]
        %v260 = vpack.c.bf16 %v259, %v259
        %v261 = vld [vmem:[#allocation5] sm:$0xff]
        %v262 = vld [vmem:[#allocation5 + $0x8] sm:$0xff]
        %v263 = vld [vmem:[#allocation5 + $0x10] sm:$0xff]
        %v264 = vld [vmem:[#allocation5 + $0x18] sm:$0xff]
        %v265 = vld [vmem:[#allocation5 + $0x20] sm:$0xff]
        %v266 = vld [vmem:[#allocation5 + $0x28] sm:$0xff]
        %v267 = vld [vmem:[#allocation5 + $0x30] sm:$0xff]
        %v268 = vld [vmem:[#allocation5 + $0x38] sm:$0xff]
        %v269 = vld [vmem:[#allocation5 + $0x40] sm:$0xff]
        %v270 = vld [vmem:[#allocation5 + $0x48] sm:$0xff]
        %v271 = vld [vmem:[#allocation5 + $0x50] sm:$0xff]
        %v272 = vld [vmem:[#allocation5 + $0x58] sm:$0xff]
        %v273 = vld [vmem:[#allocation5 + $0x60] sm:$0xff]
        %v274 = vld [vmem:[#allocation5 + $0x68] sm:$0xff]
        %v275 = vld [vmem:[#allocation5 + $0x70] sm:$0xff]
        %v276 = vld [vmem:[#allocation5 + $0x78] sm:$0xff]
        %v277 = vld [vmem:[%s2] sm:$0x3]
        %v279 = vlaneseq
        %v280 = vshrl.u32 %v279, 7
        %v281 = vsub.s32 0, %v280
        %v282 = vrot.slane %v277, %v281
        %v283 = vlaneseq
        %v284 = vshrl.u32 %v283, 7
        %v285 = vsub.s32 1, %v284
        %v286 = vrot.slane %v277, %v285
        %v305 = vunpack.c.l.b16 %v261
        %v306 = vunpack.c.h.b16 %v261
        %v307 = vunpack.c.l.b16 %v262
        %v308 = vunpack.c.h.b16 %v262
        %v309 = vunpack.c.l.b16 %v263
        %v310 = vunpack.c.h.b16 %v263
        %v311 = vunpack.c.l.b16 %v264
        %v312 = vunpack.c.h.b16 %v264
        %v313 = vunpack.c.l.b16 %v265
        %v314 = vunpack.c.h.b16 %v265
        %v315 = vunpack.c.l.b16 %v266
        %v316 = vunpack.c.h.b16 %v266
        %v317 = vunpack.c.l.b16 %v267
        %v318 = vunpack.c.h.b16 %v267
        %v319 = vunpack.c.l.b16 %v268
        %v320 = vunpack.c.h.b16 %v268
        %v321 = vunpack.c.l.b16 %v269
        %v322 = vunpack.c.h.b16 %v269
        %v323 = vunpack.c.l.b16 %v270
        %v324 = vunpack.c.h.b16 %v270
        %v325 = vunpack.c.l.b16 %v271
        %v326 = vunpack.c.h.b16 %v271
        %v327 = vunpack.c.l.b16 %v272
        %v328 = vunpack.c.h.b16 %v272
        %v329 = vunpack.c.l.b16 %v273
        %v330 = vunpack.c.h.b16 %v273
        %v331 = vunpack.c.l.b16 %v274
        %v332 = vunpack.c.h.b16 %v274
        %v333 = vunpack.c.l.b16 %v275
        %v334 = vunpack.c.h.b16 %v275
        %v335 = vunpack.c.l.b16 %v276
        %v336 = vunpack.c.h.b16 %v276
        %v337 = vpack.c.b16 %v307, %v305
        %v338 = vpack.c.b16 %v308, %v306
        %v339 = vpack.c.b16 %v311, %v309
        %v340 = vpack.c.b16 %v312, %v310
        %v341 = vpack.c.b16 %v315, %v313
        %v342 = vpack.c.b16 %v316, %v314
        %v343 = vpack.c.b16 %v319, %v317
        %v344 = vpack.c.b16 %v320, %v318
        %v345 = vpack.c.b16 %v323, %v321
        %v346 = vpack.c.b16 %v324, %v322
        %v347 = vpack.c.b16 %v327, %v325
        %v348 = vpack.c.b16 %v328, %v326
        %v349 = vpack.c.b16 %v331, %v329
        %v350 = vpack.c.b16 %v332, %v330
        %v351 = vpack.c.b16 %v335, %v333
        %v352 = vpack.c.b16 %v336, %v334
        %369 = vmatprep.subr.bf16.mxu0 %v338
        %370 = vmatpush1.bf16.msra.mxu0 %v337
        %371 = vmatprep.subr.bf16.mxu0 %v340
        %372 = vmatpush1.bf16.msra.mxu0 %v339
        %373 = vmatprep.subr.bf16.mxu0 %v342
        %374 = vmatpush1.bf16.msra.mxu0 %v341
        %375 = vmatprep.subr.bf16.mxu0 %v344
        %376 = vmatpush1.bf16.msra.mxu0 %v343
        %377 = vmatprep.subr.bf16.mxu0 %v346
        %378 = vmatpush1.bf16.msra.mxu0 %v345
        %379 = vmatprep.subr.bf16.mxu0 %v348
        %380 = vmatpush1.bf16.msra.mxu0 %v347
        %381 = vmatprep.subr.bf16.mxu0 %v350
        %382 = vmatpush1.bf16.msra.mxu0 %v349
        %383 = vmatprep.subr.bf16.mxu0 %v352
        %384 = vmatpush1.bf16.msra.mxu0 %v351
        %385 = vmatprep.subr.bf16.mxu0 0
        %386 = vmatpush1.bf16.msra.mxu0 0
        %387 = vmatprep.subr.bf16.mxu0 0
        %388 = vmatpush1.bf16.msra.mxu0 0
        %389 = vmatprep.subr.bf16.mxu0 0
        %390 = vmatpush1.bf16.msra.mxu0 0
        %391 = vmatprep.subr.bf16.mxu0 0
        %392 = vmatpush1.bf16.msra.mxu0 0
        %393 = vmatprep.subr.bf16.mxu0 0
        %394 = vmatpush1.bf16.msra.mxu0 0
        %395 = vmatprep.subr.bf16.mxu0 0
        %396 = vmatpush1.bf16.msra.mxu0 0
        %397 = vmatprep.subr.bf16.mxu0 0
        %398 = vmatpush1.bf16.msra.mxu0 0
        %399 = vmatprep.subr.bf16.mxu0 0
        %400 = vmatpush1.bf16.msra.mxu0 0
        %401 = vmatprep.mubr.bf16.mxu0 0
        %402 = vmatmul.mubr.bf16.gmra.mrb[0].mxu0 %v260
        %v403 = vpop.f32.mrb[0].mxu0
        %v404 = vadd.f32 %v282, %v403
        %v405 = vpop.f32.mrb[0].mxu0
        %v406 = vadd.f32 %v286, %v405
        %v407 = vpop.f32.mrb[0].mxu0
        %v408 = vpop.f32.mrb[0].mxu0
        %409 = vdwg.mxu0
        %v410 = vpack.c.bf16 %v404, %v404
        %411 = vst [vmem:[%s250] sm:$0xf] %v410
        %v412 = vpack.c.bf16 %v406, %v406
        %413 = vst [vmem:[%s257] sm:$0xf] %v412
        %s414 = sand.u32 %s118, 1
        %s415 = scalar_lea.sflag [#allocation4], %s414
        %s416 = sand.u32 %s118, 1
        %s417 = smul.addr %s416, 4
        %s418 = scalar_lea.vmem [#allocation7], %s417
        %s419 = sand.u32 %s146, 1
        %s420 = scalar_lea.sflag [#allocation9], %s419
        %s421 = sand.u32 %s146, 1
        %s422 = smul.addr %s421, 4
        %s423 = scalar_lea.vmem [#allocation8], %s422
        // Predicated region
        $region41: #{tpu_custom_call.1} parent=31 // pred_check
          %p424 = pneg %p128
        $region42: #{tpu_custom_call.1} parent=31 // pred_check_branch
          %426 = sbr.rel (%p424) target = $region44
        $region43: #{tpu_custom_call.1} parent=31 // pred_region
          %s428 = ssub.s32 64, 64
          %429 = vsyncadd %s415, %s428
          %s430 = sadd.s32 %s31, %s30
          %s431 = smul.addr %s430, 64
          %s432 = scalar_lea.hbm %s3, %s431
          %s434 = sshll.u32 %s418, 4
          %s435 = int_to_ptr.vmem [resolvable:$true] %s434
          %437 = dma.vmem_to_hbm [thread:$0]  %s435, 64, %s432, %s415
        $region44: #{tpu_custom_call.1} parent=31 // pred_fallthru
          _
        // Predicated region
        $region45: #{tpu_custom_call.1} parent=31 // pred_check
          %p438 = pneg %p156
        $region46: #{tpu_custom_call.1} parent=31 // pred_check_branch
          %440 = sbr.rel (%p438) target = $region48
        $region47: #{tpu_custom_call.1} parent=31 // pred_region
          %s442 = ssub.s32 64, 64
          %443 = vsyncadd %s420, %s442
          %s444 = sadd.s32 %s31, %s30
          %s445 = smul.addr %s444, 64
          %s446 = scalar_lea.hbm %s4, %s445
          %s448 = sshll.u32 %s423, 4
          %s449 = int_to_ptr.vmem [resolvable:$true] %s448
          %451 = dma.vmem_to_hbm [thread:$0]  %s449, 64, %s446, %s420
        $region48: #{tpu_custom_call.1} parent=31 // pred_fallthru
          _
      $region32: #{tpu_custom_call.1} parent=5 // pred_fallthru
        _
      %p452 = scmp.le.s32.totalorder 2, %s21
      // Predicated region
      $region49: #{tpu_custom_call.1} parent=5 // pred_check
        %p453 = pneg %p452
      $region50: #{tpu_custom_call.1} parent=5 // pred_check_branch
        %455 = sbr.rel (%p453) target = $region52
      $region51: #{tpu_custom_call.1} parent=5 // pred_region
        %s456 = ssub.s32 %s21, 2
        // Predicated region
        $region53: #{tpu_custom_call.1} parent=51 // pred_check
          %p457 = pneg %p134
        $region54: #{tpu_custom_call.1} parent=51 // pred_check_branch
          %459 = sbr.rel (%p457) target = $region56
        $region55: #{tpu_custom_call.1} parent=51 // pred_region
          %s460 = sand.u32 %s119, 1
          %s461 = scalar_lea.sflag [#allocation4], %s460
          %s462 = sand.u32 %s119, 1
          %s463 = smul.addr %s462, 4
          %s464 = scalar_lea.vmem [#allocation7], %s463
          %465 = dma.done %s461, 64
        $region56: #{tpu_custom_call.1} parent=51 // pred_fallthru
          _
        // Predicated region
        $region57: #{tpu_custom_call.1} parent=51 // pred_check
          %p466 = pneg %p162
        $region58: #{tpu_custom_call.1} parent=51 // pred_check_branch
          %468 = sbr.rel (%p466) target = $region60
        $region59: #{tpu_custom_call.1} parent=51 // pred_region
          %s469 = sand.u32 %s147, 1
          %s470 = scalar_lea.sflag [#allocation9], %s469
          %s471 = sand.u32 %s147, 1
          %s472 = smul.addr %s471, 4
          %s473 = scalar_lea.vmem [#allocation8], %s472
          %474 = dma.done %s470, 64
        $region60: #{tpu_custom_call.1} parent=51 // pred_fallthru
          _
      $region52: #{tpu_custom_call.1} parent=5 // pred_fallthru
        _
    $region6: #{tpu_custom_call.1} parent=1 // loop_footer
      %s25 = sadd.s32 1, %s21
    $region7: #{tpu_custom_call.1} parent=1 // loop_footer_branch
      %20 = sbr.rel target = $region3
    $region8: #{tpu_custom_call.1} parent=1 // loop_exit
      _
    %475 = vsyncpa [#allocation3], 1
    %s476 = scalar_lea.sflag [#allocation3], 1
    %477 = vsyncpa %s476, 1
    %478 = vsyncpa [#allocation6], 1
    %479 = vsyncpa [#allocation4], 1
    %s480 = scalar_lea.sflag [#allocation4], 1
    %481 = vsyncpa %s480, 1
    %482 = vsyncpa [#allocation9], 1
    %s483 = scalar_lea.sflag [#allocation9], 1
    %484 = vsyncpa %s483, 1

</llo_original>
